<compile_context>
chip_gen: v7x
topology: tpu7x:2x2x1
jax: 0.10.0
libtpu: 0.0.40
codegen_flags: <defaults>
</compile_context>

<pallas_src>
import functools

import jax
import jax.numpy as jnp
from jax import lax
from jax.experimental import pallas as pl
from jax.experimental.pallas import tpu as pltpu


def _refinement_kernel(temp_ref, e_row_ref, et_ref, lab_col_ref, lab_row_ref,
                       out_ref, *, tn, num_chunks):
    """One grid step = one (tm, D) row tile of the similarity matrix.

    Streams over the resident (D, N_pad) transposed embeddings in (tm, tn) column
    chunks; accumulates three sufficient statistics (pos hinge sum, neg sum, neg
    sum-of-squares) into a single vreg-sized (8, 128) block carried through the loop.
    """
    temp = temp_ref[0, 0]
    # Fold the temperature into the (tm, D) LHS tile (cheap) instead of multiplying
    # the full (tm, N) similarity matrix.
    e_scaled = (e_row_ref[...].astype(jnp.float32) * temp).astype(et_ref.dtype)
    lab_col = lab_col_ref[...]                                   # (tm, 1) int32

    # Hoisted loop-invariants (JAX does not CSE broadcasts inside loops).
    srow = lax.broadcasted_iota(jnp.int32, (8, 128), 0)
    zeros_blk = jnp.zeros((8, 128), jnp.float32)

    def chunk(j, acc):
        col0 = pl.multiple_of(j * tn, tn)
        # (tm, tn) = (tm, D) @ (D, tn): contraction dim is already the RHS leading
        # (sublane) dim -> no in-kernel transpose of the resident operand; f32 acc.
        sim = lax.dot_general(
            e_scaled, et_ref[:, pl.ds(col0, tn)],
            dimension_numbers=(((1,), (0,)), ((), ())),
            preferred_element_type=jnp.float32)
        # No validity / diagonal masks here: padded rows & cols have zero embeddings
        # and unique sentinel labels (contribute 0 to all sums); the diagonal is
        # included as "positive" and removed analytically in the wrapper.
        same = lab_col == lab_row_ref[:, pl.ds(col0, tn)]        # (tm, tn) bool
        pos = jnp.where(same, jnp.maximum(1.0 - sim, 0.0), 0.0)
        neg = jnp.where(same, 0.0, sim)
        p_s = jnp.sum(pos * pos)
        n_s = jnp.sum(neg)
        n_q = jnp.sum(neg * neg)
        # Pack the 3 chunk scalars into a lane-dense (8, 128) block and accumulate.
        upd = jnp.where(srow == 0, p_s, zeros_blk)
        upd = jnp.where(srow == 1, n_s, upd)
        upd = jnp.where(srow == 2, n_q, upd)
        return acc + upd

    if num_chunks == 1:
        acc = chunk(jnp.int32(0), zeros_blk)
    else:
        acc = lax.fori_loop(0, num_chunks, chunk, zeros_blk,
                            unroll=num_chunks <= 8)

    # Per-tile partials (sublane 0 -> p_sum, 1 -> n_sum, 2 -> n_sq); the tiny final
    # reduce / normalization happens in the JAX wrapper.
    out_ref[0] = acc


def _default_row_tile():
    """256 on chips with a 256-wide MXU (v6e / v7x), 128 otherwise (v5e and older)."""
    try:
        kind = jax.devices()[0].device_kind.lower()
    except Exception:
        kind = ""
    return 256 if ("v6" in kind or "v7" in kind) else 128


def _pick_col_chunk(n_pad, tn_request):
    """Largest multiple of 128 that divides n_pad and is <= tn_request."""
    tn = max(128, (min(tn_request, n_pad) // 128) * 128)
    while n_pad % tn != 0:
        tn -= 128
    return tn


def _exact_pair_counts(labels, n):
    """Exact (positive, negative) off-diagonal pair counts from the label histogram."""
    lab = labels.astype(jnp.int32)
    sorted_lab = jnp.sort(lab)
    new_group = jnp.concatenate(
        [jnp.ones((1,), jnp.bool_), sorted_lab[1:] != sorted_lab[:-1]])
    group_id = jnp.cumsum(new_group.astype(jnp.int32)) - 1
    counts = jnp.zeros((n,), jnp.int32).at[group_id].add(1)
    # TODO(synk): use int64 (x64) counts for n > ~46k where n*(n-1) overflows int32.
    pos_cnt = jnp.sum(counts * counts) - n
    neg_cnt = n * (n - 1) - pos_cnt
    return pos_cnt.astype(jnp.float32), neg_cnt.astype(jnp.float32)


def refinement_loss(embeddings, labels, temperature, *, beta=0.1, tm=None, tn=512,
                    compute_dtype=jnp.bfloat16, vmem_limit_bytes=None,
                    single_buffer_resident=False):
    """Pallas TPU implementation of RefinementLoss.forward.

    embeddings: (N, D) float; labels: (N,) int; temperature: scalar float.
    Returns (total_loss, stats) matching the PyTorch module semantics (stats values
    are JAX scalars rather than Python floats).

    single_buffer_resident=True requests pipeline_mode=pl.Buffered(1) on the
    constant-index resident operands (halves their VMEM footprint on v7x for big N);
    it falls back to default buffering if the installed JAX rejects it.
    """
    n, d = embeddings.shape
    if tm is None:
        tm = _default_row_tile()
    assert tm % 128 == 0, "row tile must be a multiple of 128"
    n_pad = pl.cdiv(n, tm) * tm
    num_tiles = n_pad // tm
    tn = _pick_col_chunk(n_pad, tn)
    num_chunks = n_pad // tn

    e32 = embeddings.astype(jnp.float32)
    e = e32.astype(compute_dtype)
    lab = labels.astype(jnp.int32)
    if n_pad != n:
        # Zero-pad embeddings and give padded rows unique sentinel labels so that
        # padding contributes exactly 0 to every kernel statistic.
        e = jnp.pad(e, ((0, n_pad - n), (0, 0)))
        sentinels = jnp.max(lab) + 1 + jnp.arange(n_pad - n, dtype=jnp.int32)
        lab = jnp.concatenate([lab, sentinels])
    et = e.T                      # (D, N_pad): pre-transposed RHS -> plain NN matmul.
    lab_col = lab.reshape(n_pad, 1)
    lab_row = lab.reshape(1, n_pad)
    temp = jnp.asarray(temperature, jnp.float32).reshape(1, 1)

    if vmem_limit_bytes is None:
        isz = jnp.dtype(compute_dtype).itemsize
        est = (2 * n_pad * d * isz            # resident E^T (worst-case 2 buffers)
               + 4 * tm * d * isz             # LHS row tiles (2 bufs) + scaled copy
               + 2 * n_pad * 4 + 4 * tm * 4   # label row / column tiles
               + 12 * tm * tn * 4             # per-chunk f32 / mask temps
               + 2 * 8 * 128 * 4              # partial-stats output block
               + (8 << 20))                   # headroom
        vmem_limit_bytes = int(min(max(est, 32 << 20), 96 << 20))

    kernel = functools.partial(_refinement_kernel, tn=tn, num_chunks=num_chunks)

    def build(single_buffer):
        resident_kwargs = (
            dict(pipeline_mode=pl.Buffered(1)) if single_buffer else {})
        return pl.pallas_call(
            kernel,
            out_shape=jax.ShapeDtypeStruct((num_tiles, 8, 128), jnp.float32),
            grid_spec=pltpu.PrefetchScalarGridSpec(
                num_scalar_prefetch=0,
                grid=(num_tiles,),
                in_specs=[
                    pl.BlockSpec(memory_space=pltpu.MemorySpace.SMEM),  # temperature
                    pl.BlockSpec((tm, d), lambda i: (i, 0)),            # LHS row tiles
                    pl.BlockSpec((d, n_pad), lambda i: (0, 0),          # resident E^T
                                 **resident_kwargs),
                    pl.BlockSpec((tm, 1), lambda i: (i, 0)),            # label column tile
                    pl.BlockSpec((1, n_pad), lambda i: (0, 0),          # resident label row
                                 **resident_kwargs),
                ],
                out_specs=pl.BlockSpec((1, 8, 128), lambda i: (i, 0, 0)),
            ),
            compiler_params=pltpu.CompilerParams(
                dimension_semantics=("parallel",),
                vmem_limit_bytes=vmem_limit_bytes),
        )

    args = (temp, e, et, lab_col, lab_row)
    if single_buffer_resident:
        try:
            partials = build(True)(*args)
        except Exception:
            # Fall back to default (double-buffered) pipelining of the resident
            # operands if this JAX version rejects pipeline_mode=pl.Buffered(1).
            partials = build(False)(*args)
    else:
        partials = build(False)(*args)

    # ---- tiny finalize in plain JAX (num_tiles x 3 values) ----
    totals = jnp.sum(partials[:, :3, 0], axis=0)
    p_sum_k, n_sum, n_sq = totals[0], totals[1], totals[2]

    temp_f = jnp.asarray(temperature, jnp.float32)
    # The kernel includes the diagonal (a label always matches itself) as "positive";
    # remove it analytically: valid rows contribute relu(1 - temp * ||e_i||^2)^2 and
    # zero-padded rows contribute relu(1 - 0)^2 = 1 each.
    row_sq = jnp.sum(e32 * e32, axis=-1)
    diag_pos = jnp.sum(jnp.square(jnp.maximum(1.0 - temp_f * row_sq, 0.0)))
    diag_pos = diag_pos + jnp.float32(n_pad - n)
    p_sum = jnp.maximum(p_sum_k - diag_pos, 0.0)

    pos_cnt, neg_cnt = _exact_pair_counts(labels, n)

    eps = jnp.float32(1e-6)
    pos_loss = p_sum / (pos_cnt + eps)
    denom = neg_cnt + eps
    neg_mean = n_sum / denom
    # sum((x - m)^2 over negatives) = n_sq - 2 m n_sum + m^2 * count.
    # TODO(synk): switch to per-tile-centered (Chan) accumulation for unnormalized
    # embeddings / very large temperature*N where this expansion loses precision.
    neg_var = (n_sq - 2.0 * neg_mean * n_sum + neg_mean * neg_mean * neg_cnt) / denom
    total = pos_loss + jnp.abs(neg_mean) + jnp.float32(beta) * neg_var

    stats = {
        "pos_loss": pos_loss,
        "neg_mean": neg_mean,
        "neg_var": neg_var,
        "temperature": temp_f,
    }
    return total, stats


def refinement_loss_ref(embeddings, labels, temperature, beta=0.1):
    """Pure-JAX reference mirroring the PyTorch forward exactly."""
    e = embeddings.astype(jnp.float32)
    sim = e @ e.T
    labels_matrix = labels[None, :] == labels[:, None]
    eye = jnp.eye(e.shape[0], dtype=bool)
    pos_mask = jnp.where(labels_matrix & ~eye, 1.0, 0.0)
    neg_mask = jnp.where(~labels_matrix & ~eye, 1.0, 0.0)
    scaled = sim * temperature
    pos_pairs = scaled * pos_mask
    pos_loss = jnp.sum(jax.nn.relu(1.0 - pos_pairs) ** 2 * pos_mask) / (pos_mask.sum() + 1e-6)
    neg_pairs = scaled * neg_mask
    neg_mean = jnp.sum(neg_pairs * neg_mask) / (neg_mask.sum() + 1e-6)
    neg_var = jnp.sum((neg_pairs - neg_mean) ** 2 * neg_mask) / (neg_mask.sum() + 1e-6)
    total = pos_loss + jnp.abs(neg_mean) + beta * neg_var
    return total, pos_loss, neg_mean, neg_var


if __name__ == "__main__":
    # Deterministic small inputs: N=200 (exercises padding + sentinel labels), D=32,
    # 4 classes, L2-normalized embeddings.
    key = jax.random.PRNGKey(0)
    k_e, k_l = jax.random.split(key)
    N, D = 200, 32
    embeddings = jax.random.normal(k_e, (N, D), dtype=jnp.float32)
    embeddings = embeddings / jnp.linalg.norm(embeddings, axis=-1, keepdims=True)
    labels = jax.random.randint(k_l, (N,), 0, 4, dtype=jnp.int32)
    temperature = jnp.float32(0.5)

    ref_total, ref_pos, ref_mean, ref_var = refinement_loss_ref(
        embeddings, labels, temperature, beta=0.1)

    # Exact-dtype path (f32 MXU operands); tn=128 exercises the column-chunk loop
    # (2 chunks for N_pad=256).  Tight check against the pure-JAX reference.
    total32, stats32 = refinement_loss(embeddings, labels, temperature, beta=0.1,
                                       tm=128, tn=128, compute_dtype=jnp.float32)
    total32 = jax.block_until_ready(total32)
    assert jnp.allclose(total32, ref_total, rtol=1e-2, atol=1e-2), (total32, ref_total)
    assert jnp.allclose(stats32["pos_loss"], ref_pos, rtol=1e-2, atol=1e-2)
    assert jnp.allclose(stats32["neg_mean"], ref_mean, rtol=1e-2, atol=1e-2)
    assert jnp.allclose(stats32["neg_var"], ref_var, rtol=1e-2, atol=1e-2)

    # Default fast path (bf16 MXU operands, f32 accumulation, auto tm / tn / vmem
    # limit) — loose check.
    total_bf, stats_bf = refinement_loss(embeddings, labels, temperature, beta=0.1)
    total_bf = jax.block_until_ready(total_bf)
    assert jnp.isfinite(total_bf)
    assert jnp.allclose(total_bf, ref_total, rtol=5e-2, atol=5e-2), (total_bf, ref_total)

    print("KERNEL_OK")
</pallas_src>

<mosaic_0001>
module attributes {stable_mosaic.version = 11 : i64} {
  func.func @_refinement_kernel(%arg0: i32, %arg1: memref<1x1xf32, #tpu.memory_space<smem>>, %arg2: memref<128x32xf32, #tpu.memory_space<vmem>>, %arg3: memref<32x256xf32, #tpu.memory_space<vmem>>, %arg4: memref<128x1xi32, #tpu.memory_space<vmem>>, %arg5: memref<1x256xi32, #tpu.memory_space<vmem>>, %arg6: memref<1x8x128xf32, #tpu.memory_space<vmem>>) attributes {dimension_semantics = [#tpu.dimension_semantics<parallel>], iteration_bounds = array<i64: 2>, scalar_prefetch = 0 : i64, scratch_operands = 0 : i64, tpu.core_type = #tpu.core_type<tc>, window_params = [{transform_indices = @transform_0, window_bounds = array<i64: 1, 1>}, {transform_indices = @transform_1, window_bounds = array<i64: 128, 32>}, {pipeline_mode = #tpu.pipeline_mode<synchronous>, transform_indices = @transform_2, window_bounds = array<i64: 32, 256>}, {transform_indices = @transform_3, window_bounds = array<i64: 128, 1>}, {pipeline_mode = #tpu.pipeline_mode<synchronous>, transform_indices = @transform_4, window_bounds = array<i64: 1, 256>}, {transform_indices = @transform_5, window_bounds = array<i64: 1, 8, 128>}]} {
    %c0 = arith.constant 0 : index
    %c0_0 = arith.constant 0 : index
    %0 = memref.load %arg1[%c0, %c0_0] : memref<1x1xf32, #tpu.memory_space<smem>>
    %c0_1 = arith.constant 0 : index
    %c0_2 = arith.constant 0 : index
    %1 = vector.load %arg2[%c0_1, %c0_2] : memref<128x32xf32, #tpu.memory_space<vmem>>, vector<128x32xf32>
    %2 = vector.broadcast %0 : f32 to vector<128x32xf32>
    %3 = arith.mulf %1, %2 : vector<128x32xf32>
    %c0_3 = arith.constant 0 : index
    %c0_4 = arith.constant 0 : index
    %4 = vector.load %arg4[%c0_3, %c0_4] : memref<128x1xi32, #tpu.memory_space<vmem>>, vector<128x1xi32>
    %5 = tpu.iota {dimensions = array<i32: 0>} : vector<8x128xi32>
    %cst = arith.constant 0.000000e+00 : f32
    %6 = vector.broadcast %cst : f32 to vector<8x128xf32>
    %c0_i32 = arith.constant 0 : i32
    %c128_i32 = arith.constant 128 : i32
    %7 = arith.muli %c0_i32, %c128_i32 : i32
    %8 = tpu.assume_multiple %7, 128 : i32
    %c0_5 = arith.constant 0 : index
    %9 = arith.index_cast %8 : i32 to index
    %10 = vector.load %arg3[%c0_5, %9] : memref<32x256xf32, #tpu.memory_space<vmem>>, vector<32x128xf32>
    %cst_6 = arith.constant dense<0.000000e+00> : vector<128x128xf32>
    %11 = tpu.matmul %3, %10, %cst_6 {dimension_numbers = #tpu.dot_dimension_numbers<[1], [0], [0], [1], [0, 0, 1, 1], [], []>} : vector<128x32xf32>, vector<32x128xf32>, vector<128x128xf32> -> vector<128x128xf32>
    %c0_7 = arith.constant 0 : index
    %12 = arith.index_cast %8 : i32 to index
    %13 = vector.load %arg5[%c0_7, %12] : memref<1x256xi32, #tpu.memory_space<vmem>>, vector<1x128xi32>
    %14 = vector.broadcast %4 : vector<128x1xi32> to vector<128x128xi32>
    %15 = vector.broadcast %13 : vector<1x128xi32> to vector<128x128xi32>
    %16 = arith.cmpi eq, %14, %15 : vector<128x128xi32>
    %cst_8 = arith.constant 1.000000e+00 : f32
    %17 = vector.broadcast %cst_8 : f32 to vector<128x128xf32>
    %18 = arith.subf %17, %11 : vector<128x128xf32>
    %cst_9 = arith.constant 0.000000e+00 : f32
    %19 = vector.broadcast %cst_9 : f32 to vector<128x128xf32>
    %20 = arith.maximumf %18, %19 : vector<128x128xf32>
    %cst_10 = arith.constant 0.000000e+00 : f32
    %21 = vector.broadcast %cst_10 : f32 to vector<128x128xf32>
    %22 = arith.select %16, %20, %21 : vector<128x128xi1>, vector<128x128xf32>
    %cst_11 = arith.constant 0.000000e+00 : f32
    %23 = vector.broadcast %cst_11 : f32 to vector<128x128xf32>
    %24 = arith.select %16, %23, %11 : vector<128x128xi1>, vector<128x128xf32>
    %25 = arith.mulf %22, %22 : vector<128x128xf32>
    %26 = vector.shape_cast %25 : vector<128x128xf32> to vector<1x128x128xf32>
    %cst_12 = arith.constant dense<0.000000e+00> : vector<1xf32>
    %27 = vector.multi_reduction <add>, %26, %cst_12 [1, 2] : vector<1x128x128xf32> to vector<1xf32>
    %28 = vector.shape_cast %27 : vector<1xf32> to vector<1x1x1xf32>
    %29 = vector.extract %28[0, 0, 0] : f32 from vector<1x1x1xf32>
    %30 = vector.shape_cast %24 : vector<128x128xf32> to vector<1x128x128xf32>
    %cst_13 = arith.constant dense<0.000000e+00> : vector<1xf32>
    %31 = vector.multi_reduction <add>, %30, %cst_13 [1, 2] : vector<1x128x128xf32> to vector<1xf32>
    %32 = vector.shape_cast %31 : vector<1xf32> to vector<1x1x1xf32>
    %33 = vector.extract %32[0, 0, 0] : f32 from vector<1x1x1xf32>
    %34 = arith.mulf %24, %24 : vector<128x128xf32>
    %35 = vector.shape_cast %34 : vector<128x128xf32> to vector<1x128x128xf32>
    %cst_14 = arith.constant dense<0.000000e+00> : vector<1xf32>
    %36 = vector.multi_reduction <add>, %35, %cst_14 [1, 2] : vector<1x128x128xf32> to vector<1xf32>
    %37 = vector.shape_cast %36 : vector<1xf32> to vector<1x1x1xf32>
    %38 = vector.extract %37[0, 0, 0] : f32 from vector<1x1x1xf32>
    %c0_i32_15 = arith.constant 0 : i32
    %39 = vector.broadcast %c0_i32_15 : i32 to vector<8x128xi32>
    %40 = arith.cmpi eq, %5, %39 : vector<8x128xi32>
    %41 = vector.broadcast %29 : f32 to vector<8x128xf32>
    %42 = arith.select %40, %41, %6 : vector<8x128xi1>, vector<8x128xf32>
    %c1_i32 = arith.constant 1 : i32
    %43 = vector.broadcast %c1_i32 : i32 to vector<8x128xi32>
    %44 = arith.cmpi eq, %5, %43 : vector<8x128xi32>
    %45 = vector.broadcast %33 : f32 to vector<8x128xf32>
    %46 = arith.select %44, %45, %42 : vector<8x128xi1>, vector<8x128xf32>
    %c2_i32 = arith.constant 2 : i32
    %47 = vector.broadcast %c2_i32 : i32 to vector<8x128xi32>
    %48 = arith.cmpi eq, %5, %47 : vector<8x128xi32>
    %49 = vector.broadcast %38 : f32 to vector<8x128xf32>
    %50 = arith.select %48, %49, %46 : vector<8x128xi1>, vector<8x128xf32>
    %51 = arith.addf %6, %50 : vector<8x128xf32>
    %c1_i32_16 = arith.constant 1 : i32
    %c128_i32_17 = arith.constant 128 : i32
    %52 = arith.muli %c1_i32_16, %c128_i32_17 : i32
    %53 = tpu.assume_multiple %52, 128 : i32
    %c0_18 = arith.constant 0 : index
    %54 = arith.index_cast %53 : i32 to index
    %55 = vector.load %arg3[%c0_18, %54] : memref<32x256xf32, #tpu.memory_space<vmem>>, vector<32x128xf32>
    %cst_19 = arith.constant dense<0.000000e+00> : vector<128x128xf32>
    %56 = tpu.matmul %3, %55, %cst_19 {dimension_numbers = #tpu.dot_dimension_numbers<[1], [0], [0], [1], [0, 0, 1, 1], [], []>} : vector<128x32xf32>, vector<32x128xf32>, vector<128x128xf32> -> vector<128x128xf32>
    %c0_20 = arith.constant 0 : index
    %57 = arith.index_cast %53 : i32 to index
    %58 = vector.load %arg5[%c0_20, %57] : memref<1x256xi32, #tpu.memory_space<vmem>>, vector<1x128xi32>
    %59 = vector.broadcast %4 : vector<128x1xi32> to vector<128x128xi32>
    %60 = vector.broadcast %58 : vector<1x128xi32> to vector<128x128xi32>
    %61 = arith.cmpi eq, %59, %60 : vector<128x128xi32>
    %cst_21 = arith.constant 1.000000e+00 : f32
    %62 = vector.broadcast %cst_21 : f32 to vector<128x128xf32>
    %63 = arith.subf %62, %56 : vector<128x128xf32>
    %cst_22 = arith.constant 0.000000e+00 : f32
    %64 = vector.broadcast %cst_22 : f32 to vector<128x128xf32>
    %65 = arith.maximumf %63, %64 : vector<128x128xf32>
    %cst_23 = arith.constant 0.000000e+00 : f32
    %66 = vector.broadcast %cst_23 : f32 to vector<128x128xf32>
    %67 = arith.select %61, %65, %66 : vector<128x128xi1>, vector<128x128xf32>
    %cst_24 = arith.constant 0.000000e+00 : f32
    %68 = vector.broadcast %cst_24 : f32 to vector<128x128xf32>
    %69 = arith.select %61, %68, %56 : vector<128x128xi1>, vector<128x128xf32>
    %70 = arith.mulf %67, %67 : vector<128x128xf32>
    %71 = vector.shape_cast %70 : vector<128x128xf32> to vector<1x128x128xf32>
    %cst_25 = arith.constant dense<0.000000e+00> : vector<1xf32>
    %72 = vector.multi_reduction <add>, %71, %cst_25 [1, 2] : vector<1x128x128xf32> to vector<1xf32>
    %73 = vector.shape_cast %72 : vector<1xf32> to vector<1x1x1xf32>
    %74 = vector.extract %73[0, 0, 0] : f32 from vector<1x1x1xf32>
    %75 = vector.shape_cast %69 : vector<128x128xf32> to vector<1x128x128xf32>
    %cst_26 = arith.constant dense<0.000000e+00> : vector<1xf32>
    %76 = vector.multi_reduction <add>, %75, %cst_26 [1, 2] : vector<1x128x128xf32> to vector<1xf32>
    %77 = vector.shape_cast %76 : vector<1xf32> to vector<1x1x1xf32>
    %78 = vector.extract %77[0, 0, 0] : f32 from vector<1x1x1xf32>
    %79 = arith.mulf %69, %69 : vector<128x128xf32>
    %80 = vector.shape_cast %79 : vector<128x128xf32> to vector<1x128x128xf32>
    %cst_27 = arith.constant dense<0.000000e+00> : vector<1xf32>
    %81 = vector.multi_reduction <add>, %80, %cst_27 [1, 2] : vector<1x128x128xf32> to vector<1xf32>
    %82 = vector.shape_cast %81 : vector<1xf32> to vector<1x1x1xf32>
    %83 = vector.extract %82[0, 0, 0] : f32 from vector<1x1x1xf32>
    %c0_i32_28 = arith.constant 0 : i32
    %84 = vector.broadcast %c0_i32_28 : i32 to vector<8x128xi32>
    %85 = arith.cmpi eq, %5, %84 : vector<8x128xi32>
    %86 = vector.broadcast %74 : f32 to vector<8x128xf32>
    %87 = arith.select %85, %86, %6 : vector<8x128xi1>, vector<8x128xf32>
    %c1_i32_29 = arith.constant 1 : i32
    %88 = vector.broadcast %c1_i32_29 : i32 to vector<8x128xi32>
    %89 = arith.cmpi eq, %5, %88 : vector<8x128xi32>
    %90 = vector.broadcast %78 : f32 to vector<8x128xf32>
    %91 = arith.select %89, %90, %87 : vector<8x128xi1>, vector<8x128xf32>
    %c2_i32_30 = arith.constant 2 : i32
    %92 = vector.broadcast %c2_i32_30 : i32 to vector<8x128xi32>
    %93 = arith.cmpi eq, %5, %92 : vector<8x128xi32>
    %94 = vector.broadcast %83 : f32 to vector<8x128xf32>
    %95 = arith.select %93, %94, %91 : vector<8x128xi1>, vector<8x128xf32>
    %96 = arith.addf %51, %95 : vector<8x128xf32>
    %c2_i32_31 = arith.constant 2 : i32
    %c0_32 = arith.constant 0 : index
    %c0_33 = arith.constant 0 : index
    %c0_34 = arith.constant 0 : index
    %97 = vector.load %arg6[%c0_32, %c0_33, %c0_34] : memref<1x8x128xf32, #tpu.memory_space<vmem>>, vector<1x8x128xf32>
    %98 = vector.shape_cast %97 : vector<1x8x128xf32> to vector<8x128xf32>
    %99 = vector.shape_cast %96 : vector<8x128xf32> to vector<1x8x128xf32>
    tpu.vector_store %arg6[%c0_32, %c0_33, %c0_34], %99 {strides = array<i32>} : memref<1x8x128xf32, #tpu.memory_space<vmem>>, vector<1x8x128xf32>,
    return
  }
  func.func @transform_0(%arg0: i32) -> (i32, i32) {
    %c0_i32 = arith.constant 0 : i32
    %c0_i32_0 = arith.constant 0 : i32
    %c0_i32_1 = arith.constant 0 : i32
    return %c0_i32, %c0_i32_0 : i32, i32
  }
  func.func @transform_1(%arg0: i32) -> (i32, i32) {
    %c0_i32 = arith.constant 0 : i32
    %c0_i32_0 = arith.constant 0 : i32
    return %arg0, %c0_i32 : i32, i32
  }
  func.func @transform_2(%arg0: i32) -> (i32, i32) {
    %c0_i32 = arith.constant 0 : i32
    %c0_i32_0 = arith.constant 0 : i32
    %c0_i32_1 = arith.constant 0 : i32
    return %c0_i32, %c0_i32_0 : i32, i32
  }
  func.func @transform_3(%arg0: i32) -> (i32, i32) {
    %c0_i32 = arith.constant 0 : i32
    %c0_i32_0 = arith.constant 0 : i32
    return %arg0, %c0_i32 : i32, i32
  }
  func.func @transform_4(%arg0: i32) -> (i32, i32) {
    %c0_i32 = arith.constant 0 : i32
    %c0_i32_0 = arith.constant 0 : i32
    %c0_i32_1 = arith.constant 0 : i32
    return %c0_i32, %c0_i32_0 : i32, i32
  }
  func.func @transform_5(%arg0: i32) -> (i32, i32, i32) {
    %c0_i32 = arith.constant 0 : i32
    %c0_i32_0 = arith.constant 0 : i32
    %c0_i32_1 = arith.constant 0 : i32
    return %arg0, %c0_i32, %c0_i32_0 : i32, i32, i32
  }
}

</mosaic_0001>

<llo_original>
// kernel: tpu_custom_call.1
$region0: #{tpu_custom_call.1}
  #allocation0 [shape = 'u32[]', space=smem, size = 0x4, offset = 0x4, fixed_abs, tag = 'smem constant byte address 0x4 - core index']
  #allocation1 [shape = 'u32[144,128]{1,0:T(1,128)}', space=vmem, size = 0x12000, scoped, tag = 'internal scratch']
  #allocation2 [shape = 'f32[1,1]{1,0:T(1,128)S(6)}', space=smem, size = 0x200, scoped, tag = 'scoped memory for tpu_custom_call.1']
  %s0 = inlined_call_operand.<no memory space> [shape: f32[1,1], index: 0, kind: input, shape index: {}]
  %s1 = inlined_call_operand.vmem [shape: f32[256,32], index: 1, kind: input, shape index: {}]
  %s2 = inlined_call_operand.vmem [shape: f32[32,256], index: 2, kind: input, shape index: {}]
  %s3 = inlined_call_operand.vmem [shape: s32[256,1], index: 3, kind: input, shape index: {}]
  %s4 = inlined_call_operand.vmem [shape: s32[1,256], index: 4, kind: input, shape index: {}]
  %s5 = inlined_call_operand.hbm [shape: f32[2,8,128], index: 5, kind: output, shape index: {}]
  %s6 = sld [smem:[#allocation0]]
  $region53: #{tpu_custom_call.1} parent=0
    _
  %s8 = ssub.s32 1, %s6
  %s9 = scalar_select 0, %s8, %s6
  %10 = sst [smem:[#allocation2]] %s0
  $region1: #{tpu_custom_call.1} parent=0
    #allocation3 [shape = 'u8[8192]{0}', space=vmem, size = 0x2000, scoped, tag = 'output window, operand 0']
    #allocation4 [shape = 's32[2]{0}', space=sflag, size = 0x8, scoped, tag = 'scoped memory for tpu_custom_call.1']
    %11 = vsyncpa [#allocation4], 0
    %s12 = scalar_lea.sflag [#allocation4], 1
    %13 = vsyncpa %s12, 0
    loop: start=0, step=1, limit=4
    $region2: #{tpu_custom_call.1} parent=1 // loop_pre_header
      _
    $region3: #{tpu_custom_call.1} parent=1 // loop_header
      %s15 = sphi 0, %s19
      %p16 = scmp.ge.s32.totalorder %s15, 4
      %s23 = sphi 0, %s23
      %s25 = sphi 0, %s23
      %s26 = sphi 0, %s25
      %s40 = sphi 0, %s26
      %s46 = sphi 0, %s48
      %s49 = sphi 0, %s46
      %s50 = sphi 0, %s49
      %s66 = sphi 0, %s50
      %s70 = sphi 0, %s70
      %s72 = sphi 0, %s70
      %s73 = sphi 0, %s72
      %s87 = sphi 0, %s73
      %s93 = sphi 0, %s95
      %s96 = sphi 0, %s93
      %s97 = sphi 0, %s96
      %s113 = sphi 0, %s97
      %s117 = sphi 0, %s117
      %s119 = sphi 0, %s117
      %s120 = sphi 0, %s119
      %s134 = sphi 0, %s120
      %s140 = sphi 0, %s142
      %s143 = sphi 0, %s140
      %s144 = sphi 0, %s143
      %s160 = sphi 0, %s144
    $region4: #{tpu_custom_call.1} parent=1 // loop_header_branch
      %18 = sbr.rel (%p16) target = $region8
    $region5: #{tpu_custom_call.1} parent=1 // loop_body
      %s20 = ssub.s32 %s15, 1
      %s21 = ssub.s32 %s15, 2
      %s22 = sadd.s32 %s15, 1
      %s24 = sadd.s32 %s23, 1
      %p27 = scmp.eq.s32.totalorder %s15, 1
      %p28 = scmp.ne.s32.totalorder %s23, %s25
      %p29 = scmp.eq.s32.totalorder %s15, 0
      %p30 = por %p28, %p29
      %p31 = scmp.ne.s32.totalorder %s23, %s25
      %p32 = scmp.eq.s32.totalorder %s20, 1
      %p33 = por %p31, %p32
      %p34 = scmp.ne.s32.totalorder %s25, %s26
      %p35 = scmp.eq.s32.totalorder %s20, 0
      %p36 = por %p34, %p35
      %p37 = scmp.ne.s32.totalorder %s25, %s26
      %p38 = scmp.eq.s32.totalorder %s21, 1
      %p39 = por %p37, %p38
      %p41 = scmp.ne.s32.totalorder %s26, %s40
      %p42 = scmp.eq.s32.totalorder %s21, 0
      %p43 = por %p41, %p42
      %s44 = ssub.s32 %s15, %s22
      %p45 = scmp.eq.s32.totalorder %s44, 0
      %s47 = sadd.s32 %s46, 1
      %s48 = scalar_select %p45, %s46, %s47
      %p51 = pneg %p45
      %p52 = scmp.eq.s32.totalorder %s15, 1
      %p53 = por %p51, %p52
      %p54 = scmp.ne.s32.totalorder %s46, %s49
      %p55 = scmp.eq.s32.totalorder %s15, 0
      %p56 = por %p54, %p55
      %p57 = scmp.ne.s32.totalorder %s46, %s49
      %p58 = scmp.eq.s32.totalorder %s20, 1
      %p59 = por %p57, %p58
      %p60 = scmp.ne.s32.totalorder %s49, %s50
      %p61 = scmp.eq.s32.totalorder %s20, 0
      %p62 = por %p60, %p61
      %p63 = scmp.ne.s32.totalorder %s49, %s50
      %p64 = scmp.eq.s32.totalorder %s21, 1
      %p65 = por %p63, %p64
      %p67 = scmp.ne.s32.totalorder %s50, %s66
      %p68 = scmp.eq.s32.totalorder %s21, 0
      %p69 = por %p67, %p68
      %s71 = sadd.s32 %s70, 1
      %p74 = scmp.eq.s32.totalorder %s15, 1
      %p75 = scmp.ne.s32.totalorder %s70, %s72
      %p76 = scmp.eq.s32.totalorder %s15, 0
      %p77 = por %p75, %p76
      %p78 = scmp.ne.s32.totalorder %s70, %s72
      %p79 = scmp.eq.s32.totalorder %s20, 1
      %p80 = por %p78, %p79
      %p81 = scmp.ne.s32.totalorder %s72, %s73
      %p82 = scmp.eq.s32.totalorder %s20, 0
      %p83 = por %p81, %p82
      %p84 = scmp.ne.s32.totalorder %s72, %s73
      %p85 = scmp.eq.s32.totalorder %s21, 1
      %p86 = por %p84, %p85
      %p88 = scmp.ne.s32.totalorder %s73, %s87
      %p89 = scmp.eq.s32.totalorder %s21, 0
      %p90 = por %p88, %p89
      %s91 = ssub.s32 %s15, %s22
      %p92 = scmp.eq.s32.totalorder %s91, 0
      %s94 = sadd.s32 %s93, 1
      %s95 = scalar_select %p92, %s93, %s94
      %p98 = pneg %p92
      %p99 = scmp.eq.s32.totalorder %s15, 1
      %p100 = por %p98, %p99
      %p101 = scmp.ne.s32.totalorder %s93, %s96
      %p102 = scmp.eq.s32.totalorder %s15, 0
      %p103 = por %p101, %p102
      %p104 = scmp.ne.s32.totalorder %s93, %s96
      %p105 = scmp.eq.s32.totalorder %s20, 1
      %p106 = por %p104, %p105
      %p107 = scmp.ne.s32.totalorder %s96, %s97
      %p108 = scmp.eq.s32.totalorder %s20, 0
      %p109 = por %p107, %p108
      %p110 = scmp.ne.s32.totalorder %s96, %s97
      %p111 = scmp.eq.s32.totalorder %s21, 1
      %p112 = por %p110, %p111
      %p114 = scmp.ne.s32.totalorder %s97, %s113
      %p115 = scmp.eq.s32.totalorder %s21, 0
      %p116 = por %p114, %p115
      %s118 = sadd.s32 %s117, 1
      %p121 = scmp.eq.s32.totalorder %s15, 1
      %p122 = scmp.ne.s32.totalorder %s117, %s119
      %p123 = scmp.eq.s32.totalorder %s15, 0
      %p124 = por %p122, %p123
      %p125 = scmp.ne.s32.totalorder %s117, %s119
      %p126 = scmp.eq.s32.totalorder %s20, 1
      %p127 = por %p125, %p126
      %p128 = scmp.ne.s32.totalorder %s119, %s120
      %p129 = scmp.eq.s32.totalorder %s20, 0
      %p130 = por %p128, %p129
      %p131 = scmp.ne.s32.totalorder %s119, %s120
      %p132 = scmp.eq.s32.totalorder %s21, 1
      %p133 = por %p131, %p132
      %p135 = scmp.ne.s32.totalorder %s120, %s134
      %p136 = scmp.eq.s32.totalorder %s21, 0
      %p137 = por %p135, %p136
      %s138 = ssub.s32 %s15, %s22
      %p139 = scmp.eq.s32.totalorder %s138, 0
      %s141 = sadd.s32 %s140, 1
      %s142 = scalar_select %p139, %s140, %s141
      %p145 = pneg %p139
      %p146 = scmp.eq.s32.totalorder %s15, 1
      %p147 = por %p145, %p146
      %p148 = scmp.ne.s32.totalorder %s140, %s143
      %p149 = scmp.eq.s32.totalorder %s15, 0
      %p150 = por %p148, %p149
      %p151 = scmp.ne.s32.totalorder %s140, %s143
      %p152 = scmp.eq.s32.totalorder %s20, 1
      %p153 = por %p151, %p152
      %p154 = scmp.ne.s32.totalorder %s143, %s144
      %p155 = scmp.eq.s32.totalorder %s20, 0
      %p156 = por %p154, %p155
      %p157 = scmp.ne.s32.totalorder %s143, %s144
      %p158 = scmp.eq.s32.totalorder %s21, 1
      %p159 = por %p157, %p158
      %p161 = scmp.ne.s32.totalorder %s144, %s160
      %p162 = scmp.eq.s32.totalorder %s21, 0
      %p163 = por %p161, %p162
      %p164 = scmp.le.s32.totalorder 1, %s15
      %p165 = scmp.lt.s32.totalorder %s15, 3
      %p166 = pnand %p164, %p165
      %p167 = pneg %p166
      // Predicated region
      $region9: #{tpu_custom_call.1} parent=5 // pred_check
        _
      $region10: #{tpu_custom_call.1} parent=5 // pred_check_branch
        %169 = sbr.rel (%p166) target = $region12
      $region11: #{tpu_custom_call.1} parent=5 // pred_region
        %s170 = ssub.s32 %s15, 1
        // Predicated region
        $region13: #{tpu_custom_call.1} parent=11 // pred_check
          %p171 = pneg %p36
        $region14: #{tpu_custom_call.1} parent=11 // pred_check_branch
          %173 = sbr.rel (%p171) target = $region16
        $region15: #{tpu_custom_call.1} parent=11 // pred_region
          _
        $region16: #{tpu_custom_call.1} parent=11 // pred_fallthru
          _
        // Predicated region
        $region17: #{tpu_custom_call.1} parent=11 // pred_check
          %p174 = pneg %p83
        $region18: #{tpu_custom_call.1} parent=11 // pred_check_branch
          %176 = sbr.rel (%p174) target = $region20
        $region19: #{tpu_custom_call.1} parent=11 // pred_region
          _
        $region20: #{tpu_custom_call.1} parent=11 // pred_fallthru
          _
        // Predicated region
        $region21: #{tpu_custom_call.1} parent=11 // pred_check
          %p177 = pneg %p130
        $region22: #{tpu_custom_call.1} parent=11 // pred_check_branch
          %179 = sbr.rel (%p177) target = $region24
        $region23: #{tpu_custom_call.1} parent=11 // pred_region
          _
        $region24: #{tpu_custom_call.1} parent=11 // pred_fallthru
          _
      $region12: #{tpu_custom_call.1} parent=5 // pred_fallthru
        _
      %p180 = scmp.lt.s32.totalorder %s15, 2
      // Predicated region
      $region25: #{tpu_custom_call.1} parent=5 // pred_check
        %p181 = pneg %p180
      $region26: #{tpu_custom_call.1} parent=5 // pred_check_branch
        %183 = sbr.rel (%p181) target = $region28
      $region27: #{tpu_custom_call.1} parent=5 // pred_region
        // Predicated region
        $region29: #{tpu_custom_call.1} parent=27 // pred_check
          %p184 = pneg %p56
        $region30: #{tpu_custom_call.1} parent=27 // pred_check_branch
          %186 = sbr.rel (%p184) target = $region32
        $region31: #{tpu_custom_call.1} parent=27 // pred_region
          %s187 = smul.u32 16, %s15
          %p188 = scmp.lt.s32.totalorder %s187, 31
          %s189 = scalar_select %p188, %s187, 31
          %s190 = smul.addr %s189, 8
          %s191 = scalar_lea.vmem %s1, %s190
          %s192 = smul.u32 16, %s15
        $region32: #{tpu_custom_call.1} parent=27 // pred_fallthru
          _
        // Predicated region
        $region33: #{tpu_custom_call.1} parent=27 // pred_check
          %p193 = pneg %p103
        $region34: #{tpu_custom_call.1} parent=27 // pred_check_branch
          %195 = sbr.rel (%p193) target = $region36
        $region35: #{tpu_custom_call.1} parent=27 // pred_region
          %s196 = smul.u32 16, %s15
          %p197 = scmp.lt.s32.totalorder %s196, 31
          %s198 = scalar_select %p197, %s196, 31
          %s199 = smul.addr %s198, 8
          %s200 = scalar_lea.vmem %s3, %s199
          %s201 = smul.u32 16, %s15
        $region36: #{tpu_custom_call.1} parent=27 // pred_fallthru
          _
      $region28: #{tpu_custom_call.1} parent=5 // pred_fallthru
        _
      %p202 = scmp.le.s32.totalorder 1, %s15
      %p203 = scmp.lt.s32.totalorder %s15, 3
      %p204 = pnand %p202, %p203
      %p205 = pneg %p204
      // Predicated region
      $region37: #{tpu_custom_call.1} parent=5 // pred_check
        _
      $region38: #{tpu_custom_call.1} parent=5 // pred_check_branch
        %207 = sbr.rel (%p204) target = $region40
      $region39: #{tpu_custom_call.1} parent=5 // pred_region
        %s208 = ssub.s32 %s15, 1
        %p209 = pneg %p36
        %p210 = pneg %p33
        %s211 = smul.u32 16, %s20
        %p212 = scmp.lt.s32.totalorder %s211, 31
        %s213 = scalar_select %p212, %s211, 31
        %s214 = smul.addr %s213, 8
        %s215 = scalar_lea.vmem %s1, %s214
        %p216 = pneg %p62
        %p217 = pneg %p59
        %p218 = pneg %p83
        %p219 = pneg %p80
        %s220 = smul.u32 16, %s20
        %p221 = scmp.lt.s32.totalorder %s220, 31
        %s222 = scalar_select %p221, %s220, 31
        %s223 = smul.addr %s222, 8
        %s224 = scalar_lea.vmem %s3, %s223
        %p225 = pneg %p109
        %p226 = pneg %p106
        %p227 = pneg %p130
        %p228 = pneg %p127
        %p229 = pneg %p156
        %p230 = pneg %p153
        %s231 = sand.u32 %s143, 1
        %s232 = scalar_lea.sflag [#allocation4], %s231
        %s233 = sand.u32 %s143, 1
        %s234 = smul.addr %s233, 8
        %s235 = scalar_lea.vmem [#allocation3], %s234
        %s236 = smul.u32 16, %s20
        %p237 = scmp.lt.s32.totalorder %s236, 31
        %s238 = scalar_select %p237, %s236, 31
        %s239 = smul.addr %s238, 8
        %s240 = scalar_lea.vmem %s1, %s239
        %s241 = smul.u32 16, %s20
        %s242 = smul.u32 16, %s20
        %p243 = scmp.lt.s32.totalorder %s242, 31
        %s244 = scalar_select %p243, %s242, 31
        %s245 = smul.addr %s244, 8
        %s246 = scalar_lea.vmem %s3, %s245
        %s247 = smul.u32 16, %s20
        %s248 = sld [smem:[#allocation2]]
        %v249 = vld [vmem:[%s240] sm:$0xff]
        %v250 = vld [vmem:[%s240 + $0x8] sm:$0xff]
        %v251 = vld [vmem:[%s240 + $0x10] sm:$0xff]
        %v252 = vld [vmem:[%s240 + $0x18] sm:$0xff]
        %v253 = vld [vmem:[%s240 + $0x20] sm:$0xff]
        %v254 = vld [vmem:[%s240 + $0x28] sm:$0xff]
        %v255 = vld [vmem:[%s240 + $0x30] sm:$0xff]
        %v256 = vld [vmem:[%s240 + $0x38] sm:$0xff]
        %v257 = vld [vmem:[%s240 + $0x40] sm:$0xff]
        %v258 = vld [vmem:[%s240 + $0x48] sm:$0xff]
        %v259 = vld [vmem:[%s240 + $0x50] sm:$0xff]
        %v260 = vld [vmem:[%s240 + $0x58] sm:$0xff]
        %v261 = vld [vmem:[%s240 + $0x60] sm:$0xff]
        %v262 = vld [vmem:[%s240 + $0x68] sm:$0xff]
        %v263 = vld [vmem:[%s240 + $0x70] sm:$0xff]
        %v264 = vld [vmem:[%s240 + $0x78] sm:$0xff]
        %v265 = vstv %s248
        %v266 = vmul.f32 %v249, %v265
        %v267 = vmul.f32 %v250, %v265
        %v268 = vmul.f32 %v251, %v265
        %v269 = vmul.f32 %v252, %v265
        %v270 = vmul.f32 %v253, %v265
        %v271 = vmul.f32 %v254, %v265
        %v272 = vmul.f32 %v255, %v265
        %v273 = vmul.f32 %v256, %v265
        %v274 = vmul.f32 %v257, %v265
        %v275 = vmul.f32 %v258, %v265
        %v276 = vmul.f32 %v259, %v265
        %v277 = vmul.f32 %v260, %v265
        %v278 = vmul.f32 %v261, %v265
        %v279 = vmul.f32 %v262, %v265
        %v280 = vmul.f32 %v263, %v265
        %v281 = vmul.f32 %v264, %v265
        %v282 = vld [vmem:[%s246] sm:$0xff]
        %v283 = vld [vmem:[%s246 + $0x8] sm:$0xff]
        %v284 = vld [vmem:[%s246 + $0x10] sm:$0xff]
        %v285 = vld [vmem:[%s246 + $0x18] sm:$0xff]
        %v286 = vld [vmem:[%s246 + $0x20] sm:$0xff]
        %v287 = vld [vmem:[%s246 + $0x28] sm:$0xff]
        %v288 = vld [vmem:[%s246 + $0x30] sm:$0xff]
        %v289 = vld [vmem:[%s246 + $0x38] sm:$0xff]
        %v290 = vld [vmem:[%s246 + $0x40] sm:$0xff]
        %v291 = vld [vmem:[%s246 + $0x48] sm:$0xff]
        %v292 = vld [vmem:[%s246 + $0x50] sm:$0xff]
        %v293 = vld [vmem:[%s246 + $0x58] sm:$0xff]
        %v294 = vld [vmem:[%s246 + $0x60] sm:$0xff]
        %v295 = vld [vmem:[%s246 + $0x68] sm:$0xff]
        %v296 = vld [vmem:[%s246 + $0x70] sm:$0xff]
        %v297 = vld [vmem:[%s246 + $0x78] sm:$0xff]
        %v298 = vlaneseq
        %v299 = vshrl.u32 %v298, 7
        %v300 = vld [vmem:[%s2] sm:$0xff]
        %v301 = vld [vmem:[%s2 + $0x10] sm:$0xff]
        %v302 = vld [vmem:[%s2 + $0x20] sm:$0xff]
        %v303 = vld [vmem:[%s2 + $0x30] sm:$0xff]
        %vm304 = vcmask 261120
        %v306 = vsel %vm304, %v266, 0
        %v309 = vsel %vm304, %v267, 0
        %v312 = vsel %vm304, %v268, 0
        %v315 = vsel %vm304, %v269, 0
        %v318 = vsel %vm304, %v270, 0
        %v321 = vsel %vm304, %v271, 0
        %v324 = vsel %vm304, %v272, 0
        %v327 = vsel %vm304, %v273, 0
        %v330 = vsel %vm304, %v274, 0
        %v333 = vsel %vm304, %v275, 0
        %v336 = vsel %vm304, %v276, 0
        %v339 = vsel %vm304, %v277, 0
        %v342 = vsel %vm304, %v278, 0
        %v345 = vsel %vm304, %v279, 0
        %v348 = vsel %vm304, %v280, 0
        %v351 = vsel %vm304, %v281, 0
        %353 = vmatprep.subr.mxu0 0.0
        %354 = vmatpush1.msra.mxu0 %v300
        %355 = vmatprep.subr.mxu0 0.0
        %356 = vmatpush1.msra.mxu0 %v301
        %357 = vmatprep.subr.mxu0 0.0
        %358 = vmatpush1.msra.mxu0 %v302
        %359 = vmatprep.subr.mxu0 0.0
        %360 = vmatpush1.msra.mxu0 %v303
        %361 = vmatprep.subr.mxu0 0.0
        %362 = vmatpush1.msra.mxu0 0.0
        %363 = vmatprep.subr.mxu0 0.0
        %364 = vmatpush1.msra.mxu0 0.0
        %365 = vmatprep.subr.mxu0 0.0
        %366 = vmatpush1.msra.mxu0 0.0
        %367 = vmatprep.subr.mxu0 0.0
        %368 = vmatpush1.msra.mxu0 0.0
        %369 = vmatprep.subr.mxu0 0.0
        %370 = vmatpush1.msra.mxu0 0.0
        %371 = vmatprep.subr.mxu0 0.0
        %372 = vmatpush1.msra.mxu0 0.0
        %373 = vmatprep.subr.mxu0 0.0
        %374 = vmatpush1.msra.mxu0 0.0
        %375 = vmatprep.subr.mxu0 0.0
        %376 = vmatpush1.msra.mxu0 0.0
        %377 = vmatprep.subr.mxu0 0.0
        %378 = vmatpush1.msra.mxu0 0.0
        %379 = vmatprep.subr.mxu0 0.0
        %380 = vmatpush1.msra.mxu0 0.0
        %381 = vmatprep.subr.mxu0 0.0
        %382 = vmatpush1.msra.mxu0 0.0
        %383 = vmatprep.subr.mxu0 0.0
        %384 = vmatpush1.msra.mxu0 0.0
        %385 = vmatprep.subr.mxu0 0.0
        %386 = vmatpush1.msra.mxu0 0.0
        %387 = vmatprep.subr.mxu0 0.0
        %388 = vmatpush1.msra.mxu0 0.0
        %389 = vmatprep.subr.mxu0 0.0
        %390 = vmatpush1.msra.mxu0 0.0
        %391 = vmatprep.subr.mxu0 0.0
        %392 = vmatpush1.msra.mxu0 0.0
        %393 = vmatprep.subr.mxu0 0.0
        %394 = vmatpush1.msra.mxu0 0.0
        %395 = vmatprep.subr.mxu0 0.0
        %396 = vmatpush1.msra.mxu0 0.0
        %397 = vmatprep.subr.mxu0 0.0
        %398 = vmatpush1.msra.mxu0 0.0
        %399 = vmatprep.subr.mxu0 0.0
        %400 = vmatpush1.msra.mxu0 0.0
        %401 = vmatprep.subr.mxu0 0.0
        %402 = vmatpush1.msra.mxu0 0.0
        %403 = vmatprep.subr.mxu0 0.0
        %404 = vmatpush1.msra.mxu0 0.0
        %405 = vmatprep.subr.mxu0 0.0
        %406 = vmatpush1.msra.mxu0 0.0
        %407 = vmatprep.subr.mxu0 0.0
        %408 = vmatpush1.msra.mxu0 0.0
        %409 = vmatprep.subr.mxu0 0.0
        %410 = vmatpush1.msra.mxu0 0.0
        %411 = vmatprep.subr.mxu0 0.0
        %412 = vmatpush1.msra.mxu0 0.0
        %413 = vmatprep.subr.mxu0 0.0
        %414 = vmatpush1.msra.mxu0 0.0
        %415 = vmatprep.subr.mxu0 0.0
        %416 = vmatpush1.msra.mxu0 0.0
        %417 = vmatprep.mubr.f32.mxu0 0.0
        %418 = vmatmul.mubr.f32.gmra.mrb[0].mxu0 %v306
        %v419 = vpop.f32.mrb[0].mxu0
        %v420 = vadd.f32 0.0, %v419
        %v421 = vpop.f32.mrb[0].mxu0
        %422 = vmatprep.mubr.f32.mxu0 0.0
        %423 = vmatmul.mubr.f32.gmra.mrb[0].mxu0 %v309
        %v424 = vpop.f32.mrb[0].mxu0
        %v425 = vadd.f32 0.0, %v424
        %v426 = vpop.f32.mrb[0].mxu0
        %427 = vmatprep.mubr.f32.mxu0 0.0
        %428 = vmatmul.mubr.f32.gmra.mrb[0].mxu0 %v312
        %v429 = vpop.f32.mrb[0].mxu0
        %v430 = vadd.f32 0.0, %v429
        %v431 = vpop.f32.mrb[0].mxu0
        %432 = vmatprep.mubr.f32.mxu0 0.0
        %433 = vmatmul.mubr.f32.gmra.mrb[0].mxu0 %v315
        %v434 = vpop.f32.mrb[0].mxu0
        %v435 = vadd.f32 0.0, %v434
        %v436 = vpop.f32.mrb[0].mxu0
        %437 = vmatprep.mubr.f32.mxu0 0.0
        %438 = vmatmul.mubr.f32.gmra.mrb[0].mxu0 %v318
        %v439 = vpop.f32.mrb[0].mxu0
        %v440 = vadd.f32 0.0, %v439
        %v441 = vpop.f32.mrb[0].mxu0
        %442 = vmatprep.mubr.f32.mxu0 0.0
        %443 = vmatmul.mubr.f32.gmra.mrb[0].mxu0 %v321
        %v444 = vpop.f32.mrb[0].mxu0
        %v445 = vadd.f32 0.0, %v444
        %v446 = vpop.f32.mrb[0].mxu0
        %447 = vmatprep.mubr.f32.mxu0 0.0
        %448 = vmatmul.mubr.f32.gmra.mrb[0].mxu0 %v324
        %v449 = vpop.f32.mrb[0].mxu0
        %v450 = vadd.f32 0.0, %v449
        %v451 = vpop.f32.mrb[0].mxu0
        %452 = vmatprep.mubr.f32.mxu0 0.0
        %453 = vmatmul.mubr.f32.gmra.mrb[0].mxu0 %v327
        %v454 = vpop.f32.mrb[0].mxu0
        %v455 = vadd.f32 0.0, %v454
        %v456 = vpop.f32.mrb[0].mxu0
        %457 = vmatprep.mubr.f32.mxu0 0.0
        %458 = vmatmul.mubr.f32.gmra.mrb[0].mxu0 %v330
        %v459 = vpop.f32.mrb[0].mxu0
        %v460 = vadd.f32 0.0, %v459
        %v461 = vpop.f32.mrb[0].mxu0
        %462 = vmatprep.mubr.f32.mxu0 0.0
        %463 = vmatmul.mubr.f32.gmra.mrb[0].mxu0 %v333
        %v464 = vpop.f32.mrb[0].mxu0
        %v465 = vadd.f32 0.0, %v464
        %v466 = vpop.f32.mrb[0].mxu0
        %467 = vmatprep.mubr.f32.mxu0 0.0
        %468 = vmatmul.mubr.f32.gmra.mrb[0].mxu0 %v336
        %v469 = vpop.f32.mrb[0].mxu0
        %v470 = vadd.f32 0.0, %v469
        %v471 = vpop.f32.mrb[0].mxu0
        %472 = vmatprep.mubr.f32.mxu0 0.0
        %473 = vmatmul.mubr.f32.gmra.mrb[0].mxu0 %v339
        %v474 = vpop.f32.mrb[0].mxu0
        %v475 = vadd.f32 0.0, %v474
        %v476 = vpop.f32.mrb[0].mxu0
        %477 = vmatprep.mubr.f32.mxu0 0.0
        %478 = vmatmul.mubr.f32.gmra.mrb[0].mxu0 %v342
        %v479 = vpop.f32.mrb[0].mxu0
        %v480 = vadd.f32 0.0, %v479
        %v481 = vpop.f32.mrb[0].mxu0
        %482 = vmatprep.mubr.f32.mxu0 0.0
        %483 = vmatmul.mubr.f32.gmra.mrb[0].mxu0 %v345
        %v484 = vpop.f32.mrb[0].mxu0
        %v485 = vadd.f32 0.0, %v484
        %v486 = vpop.f32.mrb[0].mxu0
        %487 = vmatprep.mubr.f32.mxu0 0.0
        %488 = vmatmul.mubr.f32.gmra.mrb[0].mxu0 %v348
        %v489 = vpop.f32.mrb[0].mxu0
        %v490 = vadd.f32 0.0, %v489
        %v491 = vpop.f32.mrb[0].mxu0
        %492 = vmatprep.mubr.f32.mxu0 0.0
        %493 = vmatmul.mubr.f32.gmra.mrb[0].mxu0 %v351
        %v494 = vpop.f32.mrb[0].mxu0
        %v495 = vadd.f32 0.0, %v494
        %v496 = vpop.f32.mrb[0].mxu0
        %497 = vdwg.mxu0
        %v498 = vld [vmem:[%s4] sm:$0x1]
        %499 = vset.pattern.permute.xlu0 0
        %500 = vperm.xlu0 %499, %v282
        %v501 = vpop.permute.xlu0 %500
        %502 = vset.pattern.permute.xlu0 0
        %503 = vperm.xlu0 %502, %v283
        %v504 = vpop.permute.xlu0 %503
        %505 = vset.pattern.permute.xlu0 0
        %506 = vperm.xlu0 %505, %v284
        %v507 = vpop.permute.xlu0 %506
        %508 = vset.pattern.permute.xlu0 0
        %509 = vperm.xlu0 %508, %v285
        %v510 = vpop.permute.xlu0 %509
        %511 = vset.pattern.permute.xlu0 0
        %512 = vperm.xlu0 %511, %v286
        %v513 = vpop.permute.xlu0 %512
        %514 = vset.pattern.permute.xlu0 0
        %515 = vperm.xlu0 %514, %v287
        %v516 = vpop.permute.xlu0 %515
        %517 = vset.pattern.permute.xlu0 0
        %518 = vperm.xlu0 %517, %v288
        %v519 = vpop.permute.xlu0 %518
        %520 = vset.pattern.permute.xlu0 0
        %521 = vperm.xlu0 %520, %v289
        %v522 = vpop.permute.xlu0 %521
        %523 = vset.pattern.permute.xlu0 0
        %524 = vperm.xlu0 %523, %v290
        %v525 = vpop.permute.xlu0 %524
        %526 = vset.pattern.permute.xlu0 0
        %527 = vperm.xlu0 %526, %v291
        %v528 = vpop.permute.xlu0 %527
        %529 = vset.pattern.permute.xlu0 0
        %530 = vperm.xlu0 %529, %v292
        %v531 = vpop.permute.xlu0 %530
        %532 = vset.pattern.permute.xlu0 0
        %533 = vperm.xlu0 %532, %v293
        %v534 = vpop.permute.xlu0 %533
        %535 = vset.pattern.permute.xlu0 0
        %536 = vperm.xlu0 %535, %v294
        %v537 = vpop.permute.xlu0 %536
        %538 = vset.pattern.permute.xlu0 0
        %539 = vperm.xlu0 %538, %v295
        %v540 = vpop.permute.xlu0 %539
        %541 = vset.pattern.permute.xlu0 0
        %542 = vperm.xlu0 %541, %v296
        %v543 = vpop.permute.xlu0 %542
        %544 = vset.pattern.permute.xlu0 0
        %545 = vperm.xlu0 %544, %v297
        %v546 = vpop.permute.xlu0 %545
        %v547 = vlaneseq
        %v548 = vshrl.u32 %v547, 7
        %v549 = vsub.s32 0, %v548
        %v550 = vrot.slane %v498, %v549
        %vm551 = vcmp.eq.s32.totalorder %v501, %v550
        %vm552 = vcmp.eq.s32.totalorder %v504, %v550
        %vm553 = vcmp.eq.s32.totalorder %v507, %v550
        %vm554 = vcmp.eq.s32.totalorder %v510, %v550
        %vm555 = vcmp.eq.s32.totalorder %v513, %v550
        %vm556 = vcmp.eq.s32.totalorder %v516, %v550
        %vm557 = vcmp.eq.s32.totalorder %v519, %v550
        %vm558 = vcmp.eq.s32.totalorder %v522, %v550
        %vm559 = vcmp.eq.s32.totalorder %v525, %v550
        %vm560 = vcmp.eq.s32.totalorder %v528, %v550
        %vm561 = vcmp.eq.s32.totalorder %v531, %v550
        %vm562 = vcmp.eq.s32.totalorder %v534, %v550
        %vm563 = vcmp.eq.s32.totalorder %v537, %v550
        %vm564 = vcmp.eq.s32.totalorder %v540, %v550
        %vm565 = vcmp.eq.s32.totalorder %v543, %v550
        %vm566 = vcmp.eq.s32.totalorder %v546, %v550
        %v567 = vsub.f32 1.0, %v420
        %v568 = vsub.f32 1.0, %v425
        %v569 = vsub.f32 1.0, %v430
        %v570 = vsub.f32 1.0, %v435
        %v571 = vsub.f32 1.0, %v440
        %v572 = vsub.f32 1.0, %v445
        %v573 = vsub.f32 1.0, %v450
        %v574 = vsub.f32 1.0, %v455
        %v575 = vsub.f32 1.0, %v460
        %v576 = vsub.f32 1.0, %v465
        %v577 = vsub.f32 1.0, %v470
        %v578 = vsub.f32 1.0, %v475
        %v579 = vsub.f32 1.0, %v480
        %v580 = vsub.f32 1.0, %v485
        %v581 = vsub.f32 1.0, %v490
        %v582 = vsub.f32 1.0, %v495
        %v583 = vmax.f32 %v567, 0.0
        %v584 = vmax.f32 %v568, 0.0
        %v585 = vmax.f32 %v569, 0.0
        %v586 = vmax.f32 %v570, 0.0
        %v587 = vmax.f32 %v571, 0.0
        %v588 = vmax.f32 %v572, 0.0
        %v589 = vmax.f32 %v573, 0.0
        %v590 = vmax.f32 %v574, 0.0
        %v591 = vmax.f32 %v575, 0.0
        %v592 = vmax.f32 %v576, 0.0
        %v593 = vmax.f32 %v577, 0.0
        %v594 = vmax.f32 %v578, 0.0
        %v595 = vmax.f32 %v579, 0.0
        %v596 = vmax.f32 %v580, 0.0
        %v597 = vmax.f32 %v581, 0.0
        %v598 = vmax.f32 %v582, 0.0
        %v599 = vsel %vm551, %v583, 0.0
        %v600 = vsel %vm552, %v584, 0.0
        %v601 = vsel %vm553, %v585, 0.0
        %v602 = vsel %vm554, %v586, 0.0
        %v603 = vsel %vm555, %v587, 0.0
        %v604 = vsel %vm556, %v588, 0.0
        %v605 = vsel %vm557, %v589, 0.0
        %v606 = vsel %vm558, %v590, 0.0
        %v607 = vsel %vm559, %v591, 0.0
        %v608 = vsel %vm560, %v592, 0.0
        %v609 = vsel %vm561, %v593, 0.0
        %v610 = vsel %vm562, %v594, 0.0
        %v611 = vsel %vm563, %v595, 0.0
        %v612 = vsel %vm564, %v596, 0.0
        %v613 = vsel %vm565, %v597, 0.0
        %v614 = vsel %vm566, %v598, 0.0
        %v615 = vsel %vm551, 0.0, %v420
        %v616 = vsel %vm552, 0.0, %v425
        %v617 = vsel %vm553, 0.0, %v430
        %v618 = vsel %vm554, 0.0, %v435
        %v619 = vsel %vm555, 0.0, %v440
        %v620 = vsel %vm556, 0.0, %v445
        %v621 = vsel %vm557, 0.0, %v450
        %v622 = vsel %vm558, 0.0, %v455
        %v623 = vsel %vm559, 0.0, %v460
        %v624 = vsel %vm560, 0.0, %v465
        %v625 = vsel %vm561, 0.0, %v470
        %v626 = vsel %vm562, 0.0, %v475
        %v627 = vsel %vm563, 0.0, %v480
        %v628 = vsel %vm564, 0.0, %v485
        %v629 = vsel %vm565, 0.0, %v490
        %v630 = vsel %vm566, 0.0, %v495
        %v631 = vmul.f32 %v599, %v599
        %v632 = vmul.f32 %v600, %v600
        %v633 = vmul.f32 %v601, %v601
        %v634 = vmul.f32 %v602, %v602
        %v635 = vmul.f32 %v603, %v603
        %v636 = vmul.f32 %v604, %v604
        %v637 = vmul.f32 %v605, %v605
        %v638 = vmul.f32 %v606, %v606
        %v639 = vmul.f32 %v607, %v607
        %v640 = vmul.f32 %v608, %v608
        %v641 = vmul.f32 %v609, %v609
        %v642 = vmul.f32 %v610, %v610
        %v643 = vmul.f32 %v611, %v611
        %v644 = vmul.f32 %v612, %v612
        %v645 = vmul.f32 %v613, %v613
        %v646 = vmul.f32 %v614, %v614
        %v647 = vadd.f32 %v631, %v632
        %v648 = vadd.f32 %v647, %v633
        %v649 = vadd.f32 %v648, %v634
        %v650 = vadd.f32 %v649, %v635
        %v651 = vadd.f32 %v650, %v636
        %v652 = vadd.f32 %v651, %v637
        %v653 = vadd.f32 %v652, %v638
        %v654 = vadd.f32 %v653, %v639
        %v655 = vadd.f32 %v654, %v640
        %v656 = vadd.f32 %v655, %v641
        %v657 = vadd.f32 %v656, %v642
        %v658 = vadd.f32 %v657, %v643
        %v659 = vadd.f32 %v658, %v644
        %v660 = vadd.f32 %v659, %v645
        %v661 = vadd.f32 %v660, %v646
        %662 = vadd.xlane.f32.xlu0 %v661
        %v663 = vpop.xlane.xlu0 %662
        %v664 = vrot.slane %v663, 4
        %v665 = vadd.f32 %v663, %v664
        %v666 = vrot.slane %v665, 2
        %v667 = vadd.f32 %v665, %v666
        %v668 = vrot.slane %v667, 1
        %v669 = vadd.f32 %v667, %v668
        %s670 = vtos %v669
        %v671 = vadd.f32 %v615, %v616
        %v672 = vadd.f32 %v671, %v617
        %v673 = vadd.f32 %v672, %v618
        %v674 = vadd.f32 %v673, %v619
        %v675 = vadd.f32 %v674, %v620
        %v676 = vadd.f32 %v675, %v621
        %v677 = vadd.f32 %v676, %v622
        %v678 = vadd.f32 %v677, %v623
        %v679 = vadd.f32 %v678, %v624
        %v680 = vadd.f32 %v679, %v625
        %v681 = vadd.f32 %v680, %v626
        %v682 = vadd.f32 %v681, %v627
        %v683 = vadd.f32 %v682, %v628
        %v684 = vadd.f32 %v683, %v629
        %v685 = vadd.f32 %v684, %v630
        %686 = vadd.xlane.f32.xlu0 %v685
        %v687 = vpop.xlane.xlu0 %686
        %v688 = vrot.slane %v687, 4
        %v689 = vadd.f32 %v687, %v688
        %v690 = vrot.slane %v689, 2
        %v691 = vadd.f32 %v689, %v690
        %v692 = vrot.slane %v691, 1
        %v693 = vadd.f32 %v691, %v692
        %s694 = vtos %v693
        %v695 = vmul.f32 %v615, %v615
        %v696 = vmul.f32 %v616, %v616
        %v697 = vmul.f32 %v617, %v617
        %v698 = vmul.f32 %v618, %v618
        %v699 = vmul.f32 %v619, %v619
        %v700 = vmul.f32 %v620, %v620
        %v701 = vmul.f32 %v621, %v621
        %v702 = vmul.f32 %v622, %v622
        %v703 = vmul.f32 %v623, %v623
        %v704 = vmul.f32 %v624, %v624
        %v705 = vmul.f32 %v625, %v625
        %v706 = vmul.f32 %v626, %v626
        %v707 = vmul.f32 %v627, %v627
        %v708 = vmul.f32 %v628, %v628
        %v709 = vmul.f32 %v629, %v629
        %v710 = vmul.f32 %v630, %v630
        %v711 = vadd.f32 %v695, %v696
        %v712 = vadd.f32 %v711, %v697
        %v713 = vadd.f32 %v712, %v698
        %v714 = vadd.f32 %v713, %v699
        %v715 = vadd.f32 %v714, %v700
        %v716 = vadd.f32 %v715, %v701
        %v717 = vadd.f32 %v716, %v702
        %v718 = vadd.f32 %v717, %v703
        %v719 = vadd.f32 %v718, %v704
        %v720 = vadd.f32 %v719, %v705
        %v721 = vadd.f32 %v720, %v706
        %v722 = vadd.f32 %v721, %v707
        %v723 = vadd.f32 %v722, %v708
        %v724 = vadd.f32 %v723, %v709
        %v725 = vadd.f32 %v724, %v710
        %726 = vadd.xlane.f32.xlu0 %v725
        %v727 = vpop.xlane.xlu0 %726
        %v728 = vrot.slane %v727, 4
        %v729 = vadd.f32 %v727, %v728
        %v730 = vrot.slane %v729, 2
        %v731 = vadd.f32 %v729, %v730
        %v732 = vrot.slane %v731, 1
        %v733 = vadd.f32 %v731, %v732
        %s734 = vtos %v733
        %vm735 = vcmp.eq.s32.totalorder %v299, 0
        %v736 = vstv %s670
        %v737 = vsel %vm735, %v736, 0.0
        %vm738 = vcmp.eq.s32.totalorder %v299, 1
        %v739 = vstv %s694
        %v740 = vsel %vm738, %v739, %v737
        %vm741 = vcmp.eq.s32.totalorder %v299, 2
        %v742 = vstv %s734
        %v743 = vsel %vm741, %v742, %v740
        %v744 = vadd.f32 %v743, 0.0
        %s745 = scalar_lea.vmem %s2, 8
        %v746 = vld [vmem:[%s745] sm:$0xff]
        %v747 = vld [vmem:[%s745 + $0x10] sm:$0xff]
        %v748 = vld [vmem:[%s745 + $0x20] sm:$0xff]
        %v749 = vld [vmem:[%s745 + $0x30] sm:$0xff]
        %750 = vmatprep.subr.mxu0 0.0
        %751 = vmatpush1.msra.mxu0 %v746
        %752 = vmatprep.subr.mxu0 0.0
        %753 = vmatpush1.msra.mxu0 %v747
        %754 = vmatprep.subr.mxu0 0.0
        %755 = vmatpush1.msra.mxu0 %v748
        %756 = vmatprep.subr.mxu0 0.0
        %757 = vmatpush1.msra.mxu0 %v749
        %758 = vmatprep.subr.mxu0 0.0
        %759 = vmatpush1.msra.mxu0 0.0
        %760 = vmatprep.subr.mxu0 0.0
        %761 = vmatpush1.msra.mxu0 0.0
        %762 = vmatprep.subr.mxu0 0.0
        %763 = vmatpush1.msra.mxu0 0.0
        %764 = vmatprep.subr.mxu0 0.0
        %765 = vmatpush1.msra.mxu0 0.0
        %766 = vmatprep.subr.mxu0 0.0
        %767 = vmatpush1.msra.mxu0 0.0
        %768 = vmatprep.subr.mxu0 0.0
        %769 = vmatpush1.msra.mxu0 0.0
        %770 = vmatprep.subr.mxu0 0.0
        %771 = vmatpush1.msra.mxu0 0.0
        %772 = vmatprep.subr.mxu0 0.0
        %773 = vmatpush1.msra.mxu0 0.0
        %774 = vmatprep.subr.mxu0 0.0
        %775 = vmatpush1.msra.mxu0 0.0
        %776 = vmatprep.subr.mxu0 0.0
        %777 = vmatpush1.msra.mxu0 0.0
        %778 = vmatprep.subr.mxu0 0.0
        %779 = vmatpush1.msra.mxu0 0.0
        %780 = vmatprep.subr.mxu0 0.0
        %781 = vmatpush1.msra.mxu0 0.0
        %782 = vmatprep.subr.mxu0 0.0
        %783 = vmatpush1.msra.mxu0 0.0
        %784 = vmatprep.subr.mxu0 0.0
        %785 = vmatpush1.msra.mxu0 0.0
        %786 = vmatprep.subr.mxu0 0.0
        %787 = vmatpush1.msra.mxu0 0.0
        %788 = vmatprep.subr.mxu0 0.0
        %789 = vmatpush1.msra.mxu0 0.0
        %790 = vmatprep.subr.mxu0 0.0
        %791 = vmatpush1.msra.mxu0 0.0
        %792 = vmatprep.subr.mxu0 0.0
        %793 = vmatpush1.msra.mxu0 0.0
        %794 = vmatprep.subr.mxu0 0.0
        %795 = vmatpush1.msra.mxu0 0.0
        %796 = vmatprep.subr.mxu0 0.0
        %797 = vmatpush1.msra.mxu0 0.0
        %798 = vmatprep.subr.mxu0 0.0
        %799 = vmatpush1.msra.mxu0 0.0
        %800 = vmatprep.subr.mxu0 0.0
        %801 = vmatpush1.msra.mxu0 0.0
        %802 = vmatprep.subr.mxu0 0.0
        %803 = vmatpush1.msra.mxu0 0.0
        %804 = vmatprep.subr.mxu0 0.0
        %805 = vmatpush1.msra.mxu0 0.0
        %806 = vmatprep.subr.mxu0 0.0
        %807 = vmatpush1.msra.mxu0 0.0
        %808 = vmatprep.subr.mxu0 0.0
        %809 = vmatpush1.msra.mxu0 0.0
        %810 = vmatprep.subr.mxu0 0.0
        %811 = vmatpush1.msra.mxu0 0.0
        %812 = vmatprep.subr.mxu0 0.0
        %813 = vmatpush1.msra.mxu0 0.0
        %814 = vmatprep.mubr.f32.mxu0 0.0
        %815 = vmatmul.mubr.f32.gmra.mrb[0].mxu0 %v306
        %v816 = vpop.f32.mrb[0].mxu0
        %v817 = vadd.f32 0.0, %v816
        %v818 = vpop.f32.mrb[0].mxu0
        %819 = vmatprep.mubr.f32.mxu0 0.0
        %820 = vmatmul.mubr.f32.gmra.mrb[0].mxu0 %v309
        %v821 = vpop.f32.mrb[0].mxu0
        %v822 = vadd.f32 0.0, %v821
        %v823 = vpop.f32.mrb[0].mxu0
        %824 = vmatprep.mubr.f32.mxu0 0.0
        %825 = vmatmul.mubr.f32.gmra.mrb[0].mxu0 %v312
        %v826 = vpop.f32.mrb[0].mxu0
        %v827 = vadd.f32 0.0, %v826
        %v828 = vpop.f32.mrb[0].mxu0
        %829 = vmatprep.mubr.f32.mxu0 0.0
        %830 = vmatmul.mubr.f32.gmra.mrb[0].mxu0 %v315
        %v831 = vpop.f32.mrb[0].mxu0
        %v832 = vadd.f32 0.0, %v831
        %v833 = vpop.f32.mrb[0].mxu0
        %834 = vmatprep.mubr.f32.mxu0 0.0
        %835 = vmatmul.mubr.f32.gmra.mrb[0].mxu0 %v318
        %v836 = vpop.f32.mrb[0].mxu0
        %v837 = vadd.f32 0.0, %v836
        %v838 = vpop.f32.mrb[0].mxu0
        %839 = vmatprep.mubr.f32.mxu0 0.0
        %840 = vmatmul.mubr.f32.gmra.mrb[0].mxu0 %v321
        %v841 = vpop.f32.mrb[0].mxu0
        %v842 = vadd.f32 0.0, %v841
        %v843 = vpop.f32.mrb[0].mxu0
        %844 = vmatprep.mubr.f32.mxu0 0.0
        %845 = vmatmul.mubr.f32.gmra.mrb[0].mxu0 %v324
        %v846 = vpop.f32.mrb[0].mxu0
        %v847 = vadd.f32 0.0, %v846
        %v848 = vpop.f32.mrb[0].mxu0
        %849 = vmatprep.mubr.f32.mxu0 0.0
        %850 = vmatmul.mubr.f32.gmra.mrb[0].mxu0 %v327
        %v851 = vpop.f32.mrb[0].mxu0
        %v852 = vadd.f32 0.0, %v851
        %v853 = vpop.f32.mrb[0].mxu0
        %854 = vmatprep.mubr.f32.mxu0 0.0
        %855 = vmatmul.mubr.f32.gmra.mrb[0].mxu0 %v330
        %v856 = vpop.f32.mrb[0].mxu0
        %v857 = vadd.f32 0.0, %v856
        %v858 = vpop.f32.mrb[0].mxu0
        %859 = vmatprep.mubr.f32.mxu0 0.0
        %860 = vmatmul.mubr.f32.gmra.mrb[0].mxu0 %v333
        %v861 = vpop.f32.mrb[0].mxu0
        %v862 = vadd.f32 0.0, %v861
        %v863 = vpop.f32.mrb[0].mxu0
        %864 = vmatprep.mubr.f32.mxu0 0.0
        %865 = vmatmul.mubr.f32.gmra.mrb[0].mxu0 %v336
        %v866 = vpop.f32.mrb[0].mxu0
        %v867 = vadd.f32 0.0, %v866
        %v868 = vpop.f32.mrb[0].mxu0
        %869 = vmatprep.mubr.f32.mxu0 0.0
        %870 = vmatmul.mubr.f32.gmra.mrb[0].mxu0 %v339
        %v871 = vpop.f32.mrb[0].mxu0
        %v872 = vadd.f32 0.0, %v871
        %v873 = vpop.f32.mrb[0].mxu0
        %874 = vmatprep.mubr.f32.mxu0 0.0
        %875 = vmatmul.mubr.f32.gmra.mrb[0].mxu0 %v342
        %v876 = vpop.f32.mrb[0].mxu0
        %v877 = vadd.f32 0.0, %v876
        %v878 = vpop.f32.mrb[0].mxu0
        %879 = vmatprep.mubr.f32.mxu0 0.0
        %880 = vmatmul.mubr.f32.gmra.mrb[0].mxu0 %v345
        %v881 = vpop.f32.mrb[0].mxu0
        %v882 = vadd.f32 0.0, %v881
        %v883 = vpop.f32.mrb[0].mxu0
        %884 = vmatprep.mubr.f32.mxu0 0.0
        %885 = vmatmul.mubr.f32.gmra.mrb[0].mxu0 %v348
        %v886 = vpop.f32.mrb[0].mxu0
        %v887 = vadd.f32 0.0, %v886
        %v888 = vpop.f32.mrb[0].mxu0
        %889 = vmatprep.mubr.f32.mxu0 0.0
        %890 = vmatmul.mubr.f32.gmra.mrb[0].mxu0 %v351
        %v891 = vpop.f32.mrb[0].mxu0
        %v892 = vadd.f32 0.0, %v891
        %v893 = vpop.f32.mrb[0].mxu0
        %894 = vdwg.mxu0
        %s895 = scalar_lea.vmem %s4, 1
        %v896 = vld [vmem:[%s895] sm:$0x1]
        %v897 = vlaneseq
        %v898 = vshrl.u32 %v897, 7
        %v899 = vsub.s32 0, %v898
        %v900 = vrot.slane %v896, %v899
        %vm901 = vcmp.eq.s32.totalorder %v501, %v900
        %vm902 = vcmp.eq.s32.totalorder %v504, %v900
        %vm903 = vcmp.eq.s32.totalorder %v507, %v900
        %vm904 = vcmp.eq.s32.totalorder %v510, %v900
        %vm905 = vcmp.eq.s32.totalorder %v513, %v900
        %vm906 = vcmp.eq.s32.totalorder %v516, %v900
        %vm907 = vcmp.eq.s32.totalorder %v519, %v900
        %vm908 = vcmp.eq.s32.totalorder %v522, %v900
        %vm909 = vcmp.eq.s32.totalorder %v525, %v900
        %vm910 = vcmp.eq.s32.totalorder %v528, %v900
        %vm911 = vcmp.eq.s32.totalorder %v531, %v900
        %vm912 = vcmp.eq.s32.totalorder %v534, %v900
        %vm913 = vcmp.eq.s32.totalorder %v537, %v900
        %vm914 = vcmp.eq.s32.totalorder %v540, %v900
        %vm915 = vcmp.eq.s32.totalorder %v543, %v900
        %vm916 = vcmp.eq.s32.totalorder %v546, %v900
        %v917 = vsub.f32 1.0, %v817
        %v918 = vsub.f32 1.0, %v822
        %v919 = vsub.f32 1.0, %v827
        %v920 = vsub.f32 1.0, %v832
        %v921 = vsub.f32 1.0, %v837
        %v922 = vsub.f32 1.0, %v842
        %v923 = vsub.f32 1.0, %v847
        %v924 = vsub.f32 1.0, %v852
        %v925 = vsub.f32 1.0, %v857
        %v926 = vsub.f32 1.0, %v862
        %v927 = vsub.f32 1.0, %v867
        %v928 = vsub.f32 1.0, %v872
        %v929 = vsub.f32 1.0, %v877
        %v930 = vsub.f32 1.0, %v882
        %v931 = vsub.f32 1.0, %v887
        %v932 = vsub.f32 1.0, %v892
        %v933 = vmax.f32 %v917, 0.0
        %v934 = vmax.f32 %v918, 0.0
        %v935 = vmax.f32 %v919, 0.0
        %v936 = vmax.f32 %v920, 0.0
        %v937 = vmax.f32 %v921, 0.0
        %v938 = vmax.f32 %v922, 0.0
        %v939 = vmax.f32 %v923, 0.0
        %v940 = vmax.f32 %v924, 0.0
        %v941 = vmax.f32 %v925, 0.0
        %v942 = vmax.f32 %v926, 0.0
        %v943 = vmax.f32 %v927, 0.0
        %v944 = vmax.f32 %v928, 0.0
        %v945 = vmax.f32 %v929, 0.0
        %v946 = vmax.f32 %v930, 0.0
        %v947 = vmax.f32 %v931, 0.0
        %v948 = vmax.f32 %v932, 0.0
        %v949 = vsel %vm901, %v933, 0.0
        %v950 = vsel %vm902, %v934, 0.0
        %v951 = vsel %vm903, %v935, 0.0
        %v952 = vsel %vm904, %v936, 0.0
        %v953 = vsel %vm905, %v937, 0.0
        %v954 = vsel %vm906, %v938, 0.0
        %v955 = vsel %vm907, %v939, 0.0
        %v956 = vsel %vm908, %v940, 0.0
        %v957 = vsel %vm909, %v941, 0.0
        %v958 = vsel %vm910, %v942, 0.0
        %v959 = vsel %vm911, %v943, 0.0
        %v960 = vsel %vm912, %v944, 0.0
        %v961 = vsel %vm913, %v945, 0.0
        %v962 = vsel %vm914, %v946, 0.0
        %v963 = vsel %vm915, %v947, 0.0
        %v964 = vsel %vm916, %v948, 0.0
        %v965 = vsel %vm901, 0.0, %v817
        %v966 = vsel %vm902, 0.0, %v822
        %v967 = vsel %vm903, 0.0, %v827
        %v968 = vsel %vm904, 0.0, %v832
        %v969 = vsel %vm905, 0.0, %v837
        %v970 = vsel %vm906, 0.0, %v842
        %v971 = vsel %vm907, 0.0, %v847
        %v972 = vsel %vm908, 0.0, %v852
        %v973 = vsel %vm909, 0.0, %v857
        %v974 = vsel %vm910, 0.0, %v862
        %v975 = vsel %vm911, 0.0, %v867
        %v976 = vsel %vm912, 0.0, %v872
        %v977 = vsel %vm913, 0.0, %v877
        %v978 = vsel %vm914, 0.0, %v882
        %v979 = vsel %vm915, 0.0, %v887
        %v980 = vsel %vm916, 0.0, %v892
        %v981 = vmul.f32 %v949, %v949
        %v982 = vmul.f32 %v950, %v950
        %v983 = vmul.f32 %v951, %v951
        %v984 = vmul.f32 %v952, %v952
        %v985 = vmul.f32 %v953, %v953
        %v986 = vmul.f32 %v954, %v954
        %v987 = vmul.f32 %v955, %v955
        %v988 = vmul.f32 %v956, %v956
        %v989 = vmul.f32 %v957, %v957
        %v990 = vmul.f32 %v958, %v958
        %v991 = vmul.f32 %v959, %v959
        %v992 = vmul.f32 %v960, %v960
        %v993 = vmul.f32 %v961, %v961
        %v994 = vmul.f32 %v962, %v962
        %v995 = vmul.f32 %v963, %v963
        %v996 = vmul.f32 %v964, %v964
        %v997 = vadd.f32 %v981, %v982
        %v998 = vadd.f32 %v997, %v983
        %v999 = vadd.f32 %v998, %v984
        %v1000 = vadd.f32 %v999, %v985
        %v1001 = vadd.f32 %v1000, %v986
        %v1002 = vadd.f32 %v1001, %v987
        %v1003 = vadd.f32 %v1002, %v988
        %v1004 = vadd.f32 %v1003, %v989
        %v1005 = vadd.f32 %v1004, %v990
        %v1006 = vadd.f32 %v1005, %v991
        %v1007 = vadd.f32 %v1006, %v992
        %v1008 = vadd.f32 %v1007, %v993
        %v1009 = vadd.f32 %v1008, %v994
        %v1010 = vadd.f32 %v1009, %v995
        %v1011 = vadd.f32 %v1010, %v996
        %1012 = vadd.xlane.f32.xlu0 %v1011
        %v1013 = vpop.xlane.xlu0 %1012
        %v1014 = vrot.slane %v1013, 4
        %v1015 = vadd.f32 %v1013, %v1014
        %v1016 = vrot.slane %v1015, 2
        %v1017 = vadd.f32 %v1015, %v1016
        %v1018 = vrot.slane %v1017, 1
        %v1019 = vadd.f32 %v1017, %v1018
        %s1020 = vtos %v1019
        %v1021 = vadd.f32 %v965, %v966
        %v1022 = vadd.f32 %v1021, %v967
        %v1023 = vadd.f32 %v1022, %v968
        %v1024 = vadd.f32 %v1023, %v969
        %v1025 = vadd.f32 %v1024, %v970
        %v1026 = vadd.f32 %v1025, %v971
        %v1027 = vadd.f32 %v1026, %v972
        %v1028 = vadd.f32 %v1027, %v973
        %v1029 = vadd.f32 %v1028, %v974
        %v1030 = vadd.f32 %v1029, %v975
        %v1031 = vadd.f32 %v1030, %v976
        %v1032 = vadd.f32 %v1031, %v977
        %v1033 = vadd.f32 %v1032, %v978
        %v1034 = vadd.f32 %v1033, %v979
        %v1035 = vadd.f32 %v1034, %v980
        %1036 = vadd.xlane.f32.xlu0 %v1035
        %v1037 = vpop.xlane.xlu0 %1036
        %v1038 = vrot.slane %v1037, 4
        %v1039 = vadd.f32 %v1037, %v1038
        %v1040 = vrot.slane %v1039, 2
        %v1041 = vadd.f32 %v1039, %v1040
        %v1042 = vrot.slane %v1041, 1
        %v1043 = vadd.f32 %v1041, %v1042
        %s1044 = vtos %v1043
        %v1045 = vmul.f32 %v965, %v965
        %v1046 = vmul.f32 %v966, %v966
        %v1047 = vmul.f32 %v967, %v967
        %v1048 = vmul.f32 %v968, %v968
        %v1049 = vmul.f32 %v969, %v969
        %v1050 = vmul.f32 %v970, %v970
        %v1051 = vmul.f32 %v971, %v971
        %v1052 = vmul.f32 %v972, %v972
        %v1053 = vmul.f32 %v973, %v973
        %v1054 = vmul.f32 %v974, %v974
        %v1055 = vmul.f32 %v975, %v975
        %v1056 = vmul.f32 %v976, %v976
        %v1057 = vmul.f32 %v977, %v977
        %v1058 = vmul.f32 %v978, %v978
        %v1059 = vmul.f32 %v979, %v979
        %v1060 = vmul.f32 %v980, %v980
        %v1061 = vadd.f32 %v1045, %v1046
        %v1062 = vadd.f32 %v1061, %v1047
        %v1063 = vadd.f32 %v1062, %v1048
        %v1064 = vadd.f32 %v1063, %v1049
        %v1065 = vadd.f32 %v1064, %v1050
        %v1066 = vadd.f32 %v1065, %v1051
        %v1067 = vadd.f32 %v1066, %v1052
        %v1068 = vadd.f32 %v1067, %v1053
        %v1069 = vadd.f32 %v1068, %v1054
        %v1070 = vadd.f32 %v1069, %v1055
        %v1071 = vadd.f32 %v1070, %v1056
        %v1072 = vadd.f32 %v1071, %v1057
        %v1073 = vadd.f32 %v1072, %v1058
        %v1074 = vadd.f32 %v1073, %v1059
        %v1075 = vadd.f32 %v1074, %v1060
        %1076 = vadd.xlane.f32.xlu0 %v1075
        %v1077 = vpop.xlane.xlu0 %1076
        %v1078 = vrot.slane %v1077, 4
        %v1079 = vadd.f32 %v1077, %v1078
        %v1080 = vrot.slane %v1079, 2
        %v1081 = vadd.f32 %v1079, %v1080
        %v1082 = vrot.slane %v1081, 1
        %v1083 = vadd.f32 %v1081, %v1082
        %s1084 = vtos %v1083
        %v1085 = vstv %s1020
        %v1086 = vsel %vm735, %v1085, 0.0
        %v1087 = vstv %s1044
        %v1088 = vsel %vm738, %v1087, %v1086
        %v1089 = vstv %s1084
        %v1090 = vsel %vm741, %v1089, %v1088
        %v1091 = vadd.f32 %v744, %v1090
        %1092 = vst [vmem:[%s235] sm:$0xff] %v1091
        %s1093 = sand.u32 %s143, 1
        %s1094 = scalar_lea.sflag [#allocation4], %s1093
        %s1095 = sand.u32 %s143, 1
        %s1096 = smul.addr %s1095, 8
        %s1097 = scalar_lea.vmem [#allocation3], %s1096
        // Predicated region
        $region41: #{tpu_custom_call.1} parent=39 // pred_check
          %p1098 = pneg %p153
        $region42: #{tpu_custom_call.1} parent=39 // pred_check_branch
          %1100 = sbr.rel (%p1098) target = $region44
        $region43: #{tpu_custom_call.1} parent=39 // pred_region
          %s1102 = ssub.s32 128, 128
          %1103 = vsyncadd %s1094, %s1102
          %s1104 = smul.addr %s20, 128
          %s1105 = scalar_lea.hbm %s5, %s1104
          %s1107 = sshll.u32 %s1097, 4
          %s1108 = int_to_ptr.vmem [resolvable:$true] %s1107
          %1110 = dma.vmem_to_hbm [thread:$0]  %s1108, 128, %s1105, %s1094
        $region44: #{tpu_custom_call.1} parent=39 // pred_fallthru
          _
      $region40: #{tpu_custom_call.1} parent=5 // pred_fallthru
        _
      %p1111 = scmp.le.s32.totalorder 2, %s15
      // Predicated region
      $region45: #{tpu_custom_call.1} parent=5 // pred_check
        %p1112 = pneg %p1111
      $region46: #{tpu_custom_call.1} parent=5 // pred_check_branch
        %1114 = sbr.rel (%p1112) target = $region48
      $region47: #{tpu_custom_call.1} parent=5 // pred_region
        %s1115 = ssub.s32 %s15, 2
        // Predicated region
        $region49: #{tpu_custom_call.1} parent=47 // pred_check
          %p1116 = pneg %p159
        $region50: #{tpu_custom_call.1} parent=47 // pred_check_branch
          %1118 = sbr.rel (%p1116) target = $region52
        $region51: #{tpu_custom_call.1} parent=47 // pred_region
          %s1119 = sand.u32 %s144, 1
          %s1120 = scalar_lea.sflag [#allocation4], %s1119
          %s1121 = sand.u32 %s144, 1
          %s1122 = smul.addr %s1121, 8
          %s1123 = scalar_lea.vmem [#allocation3], %s1122
          %1124 = dma.done %s1120, 128
        $region52: #{tpu_custom_call.1} parent=47 // pred_fallthru
          _
      $region48: #{tpu_custom_call.1} parent=5 // pred_fallthru
        _
    $region6: #{tpu_custom_call.1} parent=1 // loop_footer
      %s19 = sadd.s32 1, %s15
    $region7: #{tpu_custom_call.1} parent=1 // loop_footer_branch
      %14 = sbr.rel target = $region3
    $region8: #{tpu_custom_call.1} parent=1 // loop_exit
      _
    %1125 = vsyncpa [#allocation4], 1
    %s1126 = scalar_lea.sflag [#allocation4], 1
    %1127 = vsyncpa %s1126, 1

</llo_original>
